<compile_context>
chip_gen: v6e
topology: v6e:2x2x1
jax: 0.10.0
libtpu: 0.0.40
codegen_flags: <defaults>
</compile_context>

<pallas_src>
import numpy as np
import jax
import jax.numpy as jnp
from jax.experimental import pallas as pl
from jax.experimental.pallas import tpu as pltpu

_INV_SQRT2 = 0.7071067811865476
_BN_EPS = 1e-5
_SUBLANE_PACK = 16   # bf16 sublane tile; per-tap channel count padded to this


def _gelu_exact(x):
    # PyTorch nn.GELU() default: 0.5 * x * (1 + erf(x / sqrt(2)))
    return 0.5 * x * (1.0 + jax.lax.erf(x * _INV_SQRT2))


def _round_up(x, m):
    return ((x + m - 1) // m) * m


# ----------------------------- fused Pallas kernel ---------------------------

def _make_fused_block_kernel(H, W, cin, cmid, cp):
    """bn1+gelu -> conv1(3x3) -> bn2+gelu -> conv2(3x3) -> +residual per image."""
    HW = H * W
    RD = W + 1                 # widest tap offset: (kh-1)*W + (kw-1) in [-RD, RD]
    WPAD = HW + 2 * RD         # flat scratch row: [RD zeros | H*W data | RD zeros]

    def kernel(x_ref, w1_ref, w2_ref, s1_ref, b1_ref, s2_ref, b2_ref,
               o_ref, hp1_ref, hp2_ref):
        # x_ref : (1, cin, H*W)  f32      w1_ref: (cmid, 9*cp) bf16
        # o_ref : (1, cout, H*W) f32      w2_ref: (cout, 9*cp) bf16
        # s*/b* : (c, 1) f32 folded eval-mode BN scale / bias
        # hp*   : (cp, WPAD) bf16 flat zero-margined activation scratch

        # Column-validity masks for the +/-1 horizontal taps (W is a power of 2).
        col = jax.lax.broadcasted_iota(jnp.int32, (1, HW), 1)
        j = jnp.bitwise_and(col, W - 1)
        ok_l = j != 0            # tap kw=0 reads column j-1 -> invalid at j==0
        ok_r = j != (W - 1)      # tap kw=2 reads column j+1 -> invalid at j==W-1

        def store_act(hp_ref, h_f32, c):
            # Cast to bf16 once, write the interior, and re-zero everything the
            # tap slices can read that is not overwritten (lane margins and
            # channel-padding rows).  Done every step -> megacore-safe.
            zm = jnp.zeros((c, RD), jnp.bfloat16)
            hp_ref[:c, 0:RD] = zm
            hp_ref[:c, RD + HW:WPAD] = zm
            hp_ref[:c, RD:RD + HW] = h_f32.astype(jnp.bfloat16)
            if c < cp:
                # zero weights * stale NaN would still poison the f32 accum
                hp_ref[c:, :] = jnp.zeros((cp - c, WPAD), jnp.bfloat16)

        def conv3x3(hp_ref, w_ref):
            # One fused MXU dot: (Co, 9*cp) @ (9*cp, H*W).  The 9 shifted views
            # are contiguous lane slices of the flat scratch; the zero lane
            # margins provide the top/bottom padding for free, the two masks
            # handle the left/right column wrap.
            views = []
            for k in range(9):
                kh, kw = k // 3, k % 3
                start = RD + (kh - 1) * W + (kw - 1)
                v = hp_ref[:, start:start + HW]                  # (cp, H*W) bf16
                if kw == 0:
                    v = jnp.where(ok_l, v, jnp.zeros_like(v))
                elif kw == 2:
                    v = jnp.where(ok_r, v, jnp.zeros_like(v))
                views.append(v)
            im2col = jnp.concatenate(views, axis=0)              # (9*cp, H*W)
            return jnp.dot(w_ref[...], im2col,
                           preferred_element_type=jnp.float32)   # (Co, H*W) f32

        x2d = x_ref[0]                                           # (cin, H*W) f32
        h1 = _gelu_exact(x2d * s1_ref[...] + b1_ref[...])        # bn1 + act1
        store_act(hp1_ref, h1, cin)
        a1 = conv3x3(hp1_ref, w1_ref)                            # conv1

        h2 = _gelu_exact(a1 * s2_ref[...] + b2_ref[...])         # bn2 + act2
        store_act(hp2_ref, h2, cmid)
        a2 = conv3x3(hp2_ref, w2_ref)                            # conv2

        o_ref[0] = a2 + x2d                                      # + residual

    return kernel, WPAD


# ------------------------------ wrapper --------------------------------------

def resnetv2_block_forward(x_nchw, params):
    """x_nchw: (N, Cin, H, W) f32 -> (N, Cout, H, W) f32 (PyTorch layout)."""
    N, Cin, H, W = x_nchw.shape
    Cmid = params["bn2_scale"].shape[0]
    Cout = params["w2_k"].shape[0]
    cp = params["w1_k"].shape[1] // 9
    HW = H * W
    # residual add requires matching channels (downsample is None in this config)
    assert Cout == Cin, "out_channel must equal in_channel (no downsample path)"
    # column masks are built with a bitwise AND (see TODO above for general W)
    assert W & (W - 1) == 0 and W >= 4

    x_flat = x_nchw.reshape(N, Cin, HW).astype(jnp.float32)   # reshape only

    kernel, wpad = _make_fused_block_kernel(H, W, Cin, Cmid, cp)
    y_flat = pl.pallas_call(
        kernel,
        out_shape=jax.ShapeDtypeStruct((N, Cout, HW), jnp.float32),
        grid=(N,),  # N=2 -> both v7x TCs busy; negligible per-step cost on v5e/v6e
        in_specs=[
            pl.BlockSpec((1, Cin, HW), lambda n: (n, 0, 0)),
            pl.BlockSpec((Cmid, 9 * cp), lambda n: (0, 0)),
            pl.BlockSpec((Cout, 9 * cp), lambda n: (0, 0)),
            pl.BlockSpec((Cin, 1), lambda n: (0, 0)),
            pl.BlockSpec((Cin, 1), lambda n: (0, 0)),
            pl.BlockSpec((Cmid, 1), lambda n: (0, 0)),
            pl.BlockSpec((Cmid, 1), lambda n: (0, 0)),
        ],
        out_specs=pl.BlockSpec((1, Cout, HW), lambda n: (n, 0, 0)),
        scratch_shapes=[
            pltpu.VMEM((cp, wpad), jnp.bfloat16),   # flat zero-margined h1
            pltpu.VMEM((cp, wpad), jnp.bfloat16),   # flat zero-margined h2
        ],
        compiler_params=pltpu.CompilerParams(
            # working set is ~50 KiB -> default scoped VMEM is plenty on all gens
            dimension_semantics=("parallel",),
        ),
    )(x_flat, params["w1_k"], params["w2_k"],
      params["bn1_scale"], params["bn1_bias"],
      params["bn2_scale"], params["bn2_bias"])

    return y_flat.reshape(N, Cout, H, W)


# ------------------------------ parameters -----------------------------------

def _pack_conv_weight(w_hwio_bf16, cp):
    """HWIO (3,3,ci,co) bf16 -> (co, 9*cp); column index = k*cp + c, k=kh*3+kw."""
    kh, kw, ci, co = w_hwio_bf16.shape
    w = jnp.transpose(w_hwio_bf16, (3, 0, 1, 2)).reshape(co, kh * kw, ci)
    wp = jnp.zeros((co, kh * kw, cp), jnp.bfloat16).at[:, :, :ci].set(w)
    return wp.reshape(co, kh * kw * cp)


def init_params(key, cin, cmid, cout):
    ks = jax.random.split(key, 10)
    cp = _round_up(max(cin, cmid), _SUBLANE_PACK)
    # Conv weights in HWIO; PyTorch would be OIHW (co, ci, 3, 3).
    w1 = jax.random.normal(ks[0], (3, 3, cin, cmid), jnp.float32) * 0.1
    w2 = jax.random.normal(ks[1], (3, 3, cmid, cout), jnp.float32) * 0.1
    # MXU operands in bf16; the reference uses the same bf16-rounded weights so
    # the comparison isolates in-kernel activation rounding only.
    w1_bf = w1.astype(jnp.bfloat16)
    w2_bf = w2.astype(jnp.bfloat16)

    # BatchNorm (eval mode): gamma, beta, running_mean, running_var.
    g1 = 1.0 + 0.1 * jax.random.normal(ks[2], (cin,), jnp.float32)
    b1 = 0.1 * jax.random.normal(ks[3], (cin,), jnp.float32)
    m1 = 0.1 * jax.random.normal(ks[4], (cin,), jnp.float32)
    v1 = jax.random.uniform(ks[5], (cin,), jnp.float32, 0.5, 1.5)
    g2 = 1.0 + 0.1 * jax.random.normal(ks[6], (cmid,), jnp.float32)
    b2 = 0.1 * jax.random.normal(ks[7], (cmid,), jnp.float32)
    m2 = 0.1 * jax.random.normal(ks[8], (cmid,), jnp.float32)
    v2 = jax.random.uniform(ks[9], (cmid,), jnp.float32, 0.5, 1.5)

    s1 = g1 / jnp.sqrt(v1 + _BN_EPS)
    s2 = g2 / jnp.sqrt(v2 + _BN_EPS)
    return dict(
        w1_hwio=w1_bf.astype(jnp.float32),       # reference conv weights
        w2_hwio=w2_bf.astype(jnp.float32),
        w1_k=_pack_conv_weight(w1_bf, cp),       # (cmid, 9*cp) bf16
        w2_k=_pack_conv_weight(w2_bf, cp),       # (cout, 9*cp) bf16
        bn1_scale=s1.reshape(cin, 1),
        bn1_bias=(b1 - m1 * s1).reshape(cin, 1),
        bn2_scale=s2.reshape(cmid, 1),
        bn2_bias=(b2 - m2 * s2).reshape(cmid, 1),
    )


# ------------------------------ pure-JAX reference ----------------------------

def reference_forward(x_nchw, params):
    x = x_nchw.astype(jnp.float32)

    def bn(v, s, b):
        return v * s[None, :, None, None] + b[None, :, None, None]

    h = _gelu_exact(bn(x, params["bn1_scale"][:, 0], params["bn1_bias"][:, 0]))
    h = jax.lax.conv_general_dilated(
        h, params["w1_hwio"], (1, 1), "SAME",
        dimension_numbers=("NCHW", "HWIO", "NCHW"))
    h = _gelu_exact(bn(h, params["bn2_scale"][:, 0], params["bn2_bias"][:, 0]))
    h = jax.lax.conv_general_dilated(
        h, params["w2_hwio"], (1, 1), "SAME",
        dimension_numbers=("NCHW", "HWIO", "NCHW"))
    return h + x


# --------------------------------- main ---------------------------------------

if __name__ == "__main__":
    # in_channel == out_channel (no downsample path)
    N, Cin, Cmid, Cout, H, W = 2, 4, 8, 4, 16, 16
    key = jax.random.PRNGKey(0)
    kx, kp = jax.random.split(key)
    x = jax.random.normal(kx, (N, Cin, H, W), jnp.float32)
    params = init_params(kp, Cin, Cmid, Cout)

    y = resnetv2_block_forward(x, params)
    y = jax.block_until_ready(y)

    y_ref = reference_forward(x, params)
    assert y.shape == (N, Cout, H, W)
    # bf16 weights + bf16 in-kernel activations (f32 accumulate / elementwise)
    np.testing.assert_allclose(np.asarray(y), np.asarray(y_ref), rtol=1e-2, atol=2e-2)

    print("KERNEL_OK")
</pallas_src>

<mosaic_0001>
module attributes {stable_mosaic.version = 11 : i64} {
  func.func @kernel(%arg0: i32, %arg1: memref<1x4x256xf32, #tpu.memory_space<vmem>>, %arg2: memref<8x144xbf16, #tpu.memory_space<vmem>>, %arg3: memref<4x144xbf16, #tpu.memory_space<vmem>>, %arg4: memref<4x1xf32, #tpu.memory_space<vmem>>, %arg5: memref<4x1xf32, #tpu.memory_space<vmem>>, %arg6: memref<8x1xf32, #tpu.memory_space<vmem>>, %arg7: memref<8x1xf32, #tpu.memory_space<vmem>>, %arg8: memref<1x4x256xf32, #tpu.memory_space<vmem>>, %arg9: memref<16x290xbf16, #tpu.memory_space<vmem>>, %arg10: memref<16x290xbf16, #tpu.memory_space<vmem>>) attributes {dimension_semantics = [#tpu.dimension_semantics<parallel>], iteration_bounds = array<i64: 2>, scalar_prefetch = 0 : i64, scratch_operands = 2 : i64, tpu.core_type = #tpu.core_type<tc>, window_params = [{transform_indices = @transform_0, window_bounds = array<i64: 1, 4, 256>}, {pipeline_mode = #tpu.pipeline_mode<synchronous>, transform_indices = @transform_1, window_bounds = array<i64: 8, 144>}, {pipeline_mode = #tpu.pipeline_mode<synchronous>, transform_indices = @transform_2, window_bounds = array<i64: 4, 144>}, {pipeline_mode = #tpu.pipeline_mode<synchronous>, transform_indices = @transform_3, window_bounds = array<i64: 4, 1>}, {pipeline_mode = #tpu.pipeline_mode<synchronous>, transform_indices = @transform_4, window_bounds = array<i64: 4, 1>}, {pipeline_mode = #tpu.pipeline_mode<synchronous>, transform_indices = @transform_5, window_bounds = array<i64: 8, 1>}, {pipeline_mode = #tpu.pipeline_mode<synchronous>, transform_indices = @transform_6, window_bounds = array<i64: 8, 1>}, {transform_indices = @transform_7, window_bounds = array<i64: 1, 4, 256>}]} {
    %0 = tpu.iota {dimensions = array<i32: 1>} : vector<1x256xi32>
    %c15_i32 = arith.constant 15 : i32
    %1 = vector.broadcast %c15_i32 : i32 to vector<1x256xi32>
    %2 = arith.andi %0, %1 : vector<1x256xi32>
    %c0_i32 = arith.constant 0 : i32
    %3 = vector.broadcast %c0_i32 : i32 to vector<1x256xi32>
    %4 = arith.cmpi ne, %2, %3 : vector<1x256xi32>
    %c15_i32_0 = arith.constant 15 : i32
    %5 = vector.broadcast %c15_i32_0 : i32 to vector<1x256xi32>
    %6 = arith.cmpi ne, %2, %5 : vector<1x256xi32>
    %c0 = arith.constant 0 : index
    %c0_1 = arith.constant 0 : index
    %c0_2 = arith.constant 0 : index
    %7 = vector.load %arg1[%c0, %c0_1, %c0_2] : memref<1x4x256xf32, #tpu.memory_space<vmem>>, vector<1x4x256xf32>
    %8 = vector.shape_cast %7 : vector<1x4x256xf32> to vector<4x256xf32>
    %c0_3 = arith.constant 0 : index
    %c0_4 = arith.constant 0 : index
    %9 = vector.load %arg4[%c0_3, %c0_4] : memref<4x1xf32, #tpu.memory_space<vmem>>, vector<4x1xf32>
    %10 = vector.broadcast %9 : vector<4x1xf32> to vector<4x256xf32>
    %11 = arith.mulf %8, %10 : vector<4x256xf32>
    %c0_5 = arith.constant 0 : index
    %c0_6 = arith.constant 0 : index
    %12 = vector.load %arg5[%c0_5, %c0_6] : memref<4x1xf32, #tpu.memory_space<vmem>>, vector<4x1xf32>
    %13 = vector.broadcast %12 : vector<4x1xf32> to vector<4x256xf32>
    %14 = arith.addf %11, %13 : vector<4x256xf32>
    %cst = arith.constant 5.000000e-01 : f32
    %15 = vector.broadcast %cst : f32 to vector<4x256xf32>
    %16 = arith.mulf %15, %14 : vector<4x256xf32>
    %cst_7 = arith.constant 0.707106769 : f32
    %17 = vector.broadcast %cst_7 : f32 to vector<4x256xf32>
    %18 = arith.mulf %14, %17 : vector<4x256xf32>
    %19 = math.erf %18 : vector<4x256xf32>
    %cst_8 = arith.constant 1.000000e+00 : f32
    %20 = vector.broadcast %cst_8 : f32 to vector<4x256xf32>
    %21 = arith.addf %20, %19 : vector<4x256xf32>
    %22 = arith.mulf %16, %21 : vector<4x256xf32>
    %cst_9 = arith.constant 0.000000e+00 : bf16
    %23 = vector.broadcast %cst_9 : bf16 to vector<4x17xbf16>
    %c0_10 = arith.constant 0 : index
    %c0_11 = arith.constant 0 : index
    %24 = vector.load %arg9[%c0_10, %c0_11] : memref<16x290xbf16, #tpu.memory_space<vmem>>, vector<4x17xbf16>
    tpu.vector_store %arg9[%c0_10, %c0_11], %23 {strides = array<i32>} : memref<16x290xbf16, #tpu.memory_space<vmem>>, vector<4x17xbf16>,
    %c0_12 = arith.constant 0 : index
    %c273 = arith.constant 273 : index
    %25 = vector.load %arg9[%c0_12, %c273] : memref<16x290xbf16, #tpu.memory_space<vmem>>, vector<4x17xbf16>
    tpu.vector_store %arg9[%c0_12, %c273], %23 {strides = array<i32>} : memref<16x290xbf16, #tpu.memory_space<vmem>>, vector<4x17xbf16>,
    %26 = arith.truncf %22 : vector<4x256xf32> to vector<4x256xbf16>
    %c0_13 = arith.constant 0 : index
    %c17 = arith.constant 17 : index
    %27 = vector.load %arg9[%c0_13, %c17] : memref<16x290xbf16, #tpu.memory_space<vmem>>, vector<4x256xbf16>
    tpu.vector_store %arg9[%c0_13, %c17], %26 {strides = array<i32>} : memref<16x290xbf16, #tpu.memory_space<vmem>>, vector<4x256xbf16>,
    %cst_14 = arith.constant 0.000000e+00 : bf16
    %28 = vector.broadcast %cst_14 : bf16 to vector<12x290xbf16>
    %c4 = arith.constant 4 : index
    %c0_15 = arith.constant 0 : index
    %29 = vector.load %arg9[%c4, %c0_15] : memref<16x290xbf16, #tpu.memory_space<vmem>>, vector<12x290xbf16>
    tpu.vector_store %arg9[%c4, %c0_15], %28 {strides = array<i32>} : memref<16x290xbf16, #tpu.memory_space<vmem>>, vector<12x290xbf16>,
    %c0_16 = arith.constant 0 : index
    %c0_17 = arith.constant 0 : index
    %30 = vector.load %arg9[%c0_16, %c0_17] : memref<16x290xbf16, #tpu.memory_space<vmem>>, vector<16x256xbf16>
    %cst_18 = arith.constant 0.000000e+00 : bf16
    %31 = vector.broadcast %cst_18 : bf16 to vector<16x256xbf16>
    %32 = vector.shape_cast %4 : vector<1x256xi1> to vector<1x256xi1>
    %33 = vector.broadcast %32 : vector<1x256xi1> to vector<16x256xi1>
    %34 = arith.select %33, %30, %31 : vector<16x256xi1>, vector<16x256xbf16>
    %c0_19 = arith.constant 0 : index
    %c1 = arith.constant 1 : index
    %35 = vector.load %arg9[%c0_19, %c1] : memref<16x290xbf16, #tpu.memory_space<vmem>>, vector<16x256xbf16>
    %c0_20 = arith.constant 0 : index
    %c2 = arith.constant 2 : index
    %36 = vector.load %arg9[%c0_20, %c2] : memref<16x290xbf16, #tpu.memory_space<vmem>>, vector<16x256xbf16>
    %cst_21 = arith.constant 0.000000e+00 : bf16
    %37 = vector.broadcast %cst_21 : bf16 to vector<16x256xbf16>
    %38 = vector.shape_cast %6 : vector<1x256xi1> to vector<1x256xi1>
    %39 = vector.broadcast %38 : vector<1x256xi1> to vector<16x256xi1>
    %40 = arith.select %39, %36, %37 : vector<16x256xi1>, vector<16x256xbf16>
    %c0_22 = arith.constant 0 : index
    %c16 = arith.constant 16 : index
    %41 = vector.load %arg9[%c0_22, %c16] : memref<16x290xbf16, #tpu.memory_space<vmem>>, vector<16x256xbf16>
    %cst_23 = arith.constant 0.000000e+00 : bf16
    %42 = vector.broadcast %cst_23 : bf16 to vector<16x256xbf16>
    %43 = vector.shape_cast %4 : vector<1x256xi1> to vector<1x256xi1>
    %44 = vector.broadcast %43 : vector<1x256xi1> to vector<16x256xi1>
    %45 = arith.select %44, %41, %42 : vector<16x256xi1>, vector<16x256xbf16>
    %c0_24 = arith.constant 0 : index
    %c17_25 = arith.constant 17 : index
    %46 = vector.load %arg9[%c0_24, %c17_25] : memref<16x290xbf16, #tpu.memory_space<vmem>>, vector<16x256xbf16>
    %c0_26 = arith.constant 0 : index
    %c18 = arith.constant 18 : index
    %47 = vector.load %arg9[%c0_26, %c18] : memref<16x290xbf16, #tpu.memory_space<vmem>>, vector<16x256xbf16>
    %cst_27 = arith.constant 0.000000e+00 : bf16
    %48 = vector.broadcast %cst_27 : bf16 to vector<16x256xbf16>
    %49 = vector.shape_cast %6 : vector<1x256xi1> to vector<1x256xi1>
    %50 = vector.broadcast %49 : vector<1x256xi1> to vector<16x256xi1>
    %51 = arith.select %50, %47, %48 : vector<16x256xi1>, vector<16x256xbf16>
    %c0_28 = arith.constant 0 : index
    %c32 = arith.constant 32 : index
    %52 = vector.load %arg9[%c0_28, %c32] : memref<16x290xbf16, #tpu.memory_space<vmem>>, vector<16x256xbf16>
    %cst_29 = arith.constant 0.000000e+00 : bf16
    %53 = vector.broadcast %cst_29 : bf16 to vector<16x256xbf16>
    %54 = vector.shape_cast %4 : vector<1x256xi1> to vector<1x256xi1>
    %55 = vector.broadcast %54 : vector<1x256xi1> to vector<16x256xi1>
    %56 = arith.select %55, %52, %53 : vector<16x256xi1>, vector<16x256xbf16>
    %c0_30 = arith.constant 0 : index
    %c33 = arith.constant 33 : index
    %57 = vector.load %arg9[%c0_30, %c33] : memref<16x290xbf16, #tpu.memory_space<vmem>>, vector<16x256xbf16>
    %c0_31 = arith.constant 0 : index
    %c34 = arith.constant 34 : index
    %58 = vector.load %arg9[%c0_31, %c34] : memref<16x290xbf16, #tpu.memory_space<vmem>>, vector<16x256xbf16>
    %cst_32 = arith.constant 0.000000e+00 : bf16
    %59 = vector.broadcast %cst_32 : bf16 to vector<16x256xbf16>
    %60 = vector.shape_cast %6 : vector<1x256xi1> to vector<1x256xi1>
    %61 = vector.broadcast %60 : vector<1x256xi1> to vector<16x256xi1>
    %62 = arith.select %61, %58, %59 : vector<16x256xi1>, vector<16x256xbf16>
    %63 = tpu.concatenate %34, %35, %40, %45, %46, %51, %56, %57, %62 in 0 : vector<16x256xbf16>, vector<16x256xbf16>, vector<16x256xbf16>, vector<16x256xbf16>, vector<16x256xbf16>, vector<16x256xbf16>, vector<16x256xbf16>, vector<16x256xbf16>, vector<16x256xbf16> -> vector<144x256xbf16>
    %c0_33 = arith.constant 0 : index
    %c0_34 = arith.constant 0 : index
    %64 = vector.load %arg2[%c0_33, %c0_34] : memref<8x144xbf16, #tpu.memory_space<vmem>>, vector<8x144xbf16>
    %cst_35 = arith.constant dense<0.000000e+00> : vector<8x256xf32>
    %65 = tpu.matmul %64, %63, %cst_35 {dimension_numbers = #tpu.dot_dimension_numbers<[1], [0], [0], [1], [0, 0, 1, 1], [], []>} : vector<8x144xbf16>, vector<144x256xbf16>, vector<8x256xf32> -> vector<8x256xf32>
    %c0_36 = arith.constant 0 : index
    %c0_37 = arith.constant 0 : index
    %66 = vector.load %arg6[%c0_36, %c0_37] : memref<8x1xf32, #tpu.memory_space<vmem>>, vector<8x1xf32>
    %67 = vector.broadcast %66 : vector<8x1xf32> to vector<8x256xf32>
    %68 = arith.mulf %65, %67 : vector<8x256xf32>
    %c0_38 = arith.constant 0 : index
    %c0_39 = arith.constant 0 : index
    %69 = vector.load %arg7[%c0_38, %c0_39] : memref<8x1xf32, #tpu.memory_space<vmem>>, vector<8x1xf32>
    %70 = vector.broadcast %69 : vector<8x1xf32> to vector<8x256xf32>
    %71 = arith.addf %68, %70 : vector<8x256xf32>
    %cst_40 = arith.constant 5.000000e-01 : f32
    %72 = vector.broadcast %cst_40 : f32 to vector<8x256xf32>
    %73 = arith.mulf %72, %71 : vector<8x256xf32>
    %cst_41 = arith.constant 0.707106769 : f32
    %74 = vector.broadcast %cst_41 : f32 to vector<8x256xf32>
    %75 = arith.mulf %71, %74 : vector<8x256xf32>
    %76 = math.erf %75 : vector<8x256xf32>
    %cst_42 = arith.constant 1.000000e+00 : f32
    %77 = vector.broadcast %cst_42 : f32 to vector<8x256xf32>
    %78 = arith.addf %77, %76 : vector<8x256xf32>
    %79 = arith.mulf %73, %78 : vector<8x256xf32>
    %cst_43 = arith.constant 0.000000e+00 : bf16
    %80 = vector.broadcast %cst_43 : bf16 to vector<8x17xbf16>
    %c0_44 = arith.constant 0 : index
    %c0_45 = arith.constant 0 : index
    %81 = vector.load %arg10[%c0_44, %c0_45] : memref<16x290xbf16, #tpu.memory_space<vmem>>, vector<8x17xbf16>
    tpu.vector_store %arg10[%c0_44, %c0_45], %80 {strides = array<i32>} : memref<16x290xbf16, #tpu.memory_space<vmem>>, vector<8x17xbf16>,
    %c0_46 = arith.constant 0 : index
    %c273_47 = arith.constant 273 : index
    %82 = vector.load %arg10[%c0_46, %c273_47] : memref<16x290xbf16, #tpu.memory_space<vmem>>, vector<8x17xbf16>
    tpu.vector_store %arg10[%c0_46, %c273_47], %80 {strides = array<i32>} : memref<16x290xbf16, #tpu.memory_space<vmem>>, vector<8x17xbf16>,
    %83 = arith.truncf %79 : vector<8x256xf32> to vector<8x256xbf16>
    %c0_48 = arith.constant 0 : index
    %c17_49 = arith.constant 17 : index
    %84 = vector.load %arg10[%c0_48, %c17_49] : memref<16x290xbf16, #tpu.memory_space<vmem>>, vector<8x256xbf16>
    tpu.vector_store %arg10[%c0_48, %c17_49], %83 {strides = array<i32>} : memref<16x290xbf16, #tpu.memory_space<vmem>>, vector<8x256xbf16>,
    %cst_50 = arith.constant 0.000000e+00 : bf16
    %85 = vector.broadcast %cst_50 : bf16 to vector<8x290xbf16>
    %c8 = arith.constant 8 : index
    %c0_51 = arith.constant 0 : index
    %86 = vector.load %arg10[%c8, %c0_51] : memref<16x290xbf16, #tpu.memory_space<vmem>>, vector<8x290xbf16>
    tpu.vector_store %arg10[%c8, %c0_51], %85 {strides = array<i32>} : memref<16x290xbf16, #tpu.memory_space<vmem>>, vector<8x290xbf16>,
    %c0_52 = arith.constant 0 : index
    %c0_53 = arith.constant 0 : index
    %87 = vector.load %arg10[%c0_52, %c0_53] : memref<16x290xbf16, #tpu.memory_space<vmem>>, vector<16x256xbf16>
    %cst_54 = arith.constant 0.000000e+00 : bf16
    %88 = vector.broadcast %cst_54 : bf16 to vector<16x256xbf16>
    %89 = vector.shape_cast %4 : vector<1x256xi1> to vector<1x256xi1>
    %90 = vector.broadcast %89 : vector<1x256xi1> to vector<16x256xi1>
    %91 = arith.select %90, %87, %88 : vector<16x256xi1>, vector<16x256xbf16>
    %c0_55 = arith.constant 0 : index
    %c1_56 = arith.constant 1 : index
    %92 = vector.load %arg10[%c0_55, %c1_56] : memref<16x290xbf16, #tpu.memory_space<vmem>>, vector<16x256xbf16>
    %c0_57 = arith.constant 0 : index
    %c2_58 = arith.constant 2 : index
    %93 = vector.load %arg10[%c0_57, %c2_58] : memref<16x290xbf16, #tpu.memory_space<vmem>>, vector<16x256xbf16>
    %cst_59 = arith.constant 0.000000e+00 : bf16
    %94 = vector.broadcast %cst_59 : bf16 to vector<16x256xbf16>
    %95 = vector.shape_cast %6 : vector<1x256xi1> to vector<1x256xi1>
    %96 = vector.broadcast %95 : vector<1x256xi1> to vector<16x256xi1>
    %97 = arith.select %96, %93, %94 : vector<16x256xi1>, vector<16x256xbf16>
    %c0_60 = arith.constant 0 : index
    %c16_61 = arith.constant 16 : index
    %98 = vector.load %arg10[%c0_60, %c16_61] : memref<16x290xbf16, #tpu.memory_space<vmem>>, vector<16x256xbf16>
    %cst_62 = arith.constant 0.000000e+00 : bf16
    %99 = vector.broadcast %cst_62 : bf16 to vector<16x256xbf16>
    %100 = vector.shape_cast %4 : vector<1x256xi1> to vector<1x256xi1>
    %101 = vector.broadcast %100 : vector<1x256xi1> to vector<16x256xi1>
    %102 = arith.select %101, %98, %99 : vector<16x256xi1>, vector<16x256xbf16>
    %c0_63 = arith.constant 0 : index
    %c17_64 = arith.constant 17 : index
    %103 = vector.load %arg10[%c0_63, %c17_64] : memref<16x290xbf16, #tpu.memory_space<vmem>>, vector<16x256xbf16>
    %c0_65 = arith.constant 0 : index
    %c18_66 = arith.constant 18 : index
    %104 = vector.load %arg10[%c0_65, %c18_66] : memref<16x290xbf16, #tpu.memory_space<vmem>>, vector<16x256xbf16>
    %cst_67 = arith.constant 0.000000e+00 : bf16
    %105 = vector.broadcast %cst_67 : bf16 to vector<16x256xbf16>
    %106 = vector.shape_cast %6 : vector<1x256xi1> to vector<1x256xi1>
    %107 = vector.broadcast %106 : vector<1x256xi1> to vector<16x256xi1>
    %108 = arith.select %107, %104, %105 : vector<16x256xi1>, vector<16x256xbf16>
    %c0_68 = arith.constant 0 : index
    %c32_69 = arith.constant 32 : index
    %109 = vector.load %arg10[%c0_68, %c32_69] : memref<16x290xbf16, #tpu.memory_space<vmem>>, vector<16x256xbf16>
    %cst_70 = arith.constant 0.000000e+00 : bf16
    %110 = vector.broadcast %cst_70 : bf16 to vector<16x256xbf16>
    %111 = vector.shape_cast %4 : vector<1x256xi1> to vector<1x256xi1>
    %112 = vector.broadcast %111 : vector<1x256xi1> to vector<16x256xi1>
    %113 = arith.select %112, %109, %110 : vector<16x256xi1>, vector<16x256xbf16>
    %c0_71 = arith.constant 0 : index
    %c33_72 = arith.constant 33 : index
    %114 = vector.load %arg10[%c0_71, %c33_72] : memref<16x290xbf16, #tpu.memory_space<vmem>>, vector<16x256xbf16>
    %c0_73 = arith.constant 0 : index
    %c34_74 = arith.constant 34 : index
    %115 = vector.load %arg10[%c0_73, %c34_74] : memref<16x290xbf16, #tpu.memory_space<vmem>>, vector<16x256xbf16>
    %cst_75 = arith.constant 0.000000e+00 : bf16
    %116 = vector.broadcast %cst_75 : bf16 to vector<16x256xbf16>
    %117 = vector.shape_cast %6 : vector<1x256xi1> to vector<1x256xi1>
    %118 = vector.broadcast %117 : vector<1x256xi1> to vector<16x256xi1>
    %119 = arith.select %118, %115, %116 : vector<16x256xi1>, vector<16x256xbf16>
    %120 = tpu.concatenate %91, %92, %97, %102, %103, %108, %113, %114, %119 in 0 : vector<16x256xbf16>, vector<16x256xbf16>, vector<16x256xbf16>, vector<16x256xbf16>, vector<16x256xbf16>, vector<16x256xbf16>, vector<16x256xbf16>, vector<16x256xbf16>, vector<16x256xbf16> -> vector<144x256xbf16>
    %c0_76 = arith.constant 0 : index
    %c0_77 = arith.constant 0 : index
    %121 = vector.load %arg3[%c0_76, %c0_77] : memref<4x144xbf16, #tpu.memory_space<vmem>>, vector<4x144xbf16>
    %cst_78 = arith.constant dense<0.000000e+00> : vector<4x256xf32>
    %122 = tpu.matmul %121, %120, %cst_78 {dimension_numbers = #tpu.dot_dimension_numbers<[1], [0], [0], [1], [0, 0, 1, 1], [], []>} : vector<4x144xbf16>, vector<144x256xbf16>, vector<4x256xf32> -> vector<4x256xf32>
    %123 = arith.addf %122, %8 : vector<4x256xf32>
    %c0_79 = arith.constant 0 : index
    %c0_80 = arith.constant 0 : index
    %c0_81 = arith.constant 0 : index
    %124 = vector.load %arg8[%c0_79, %c0_80, %c0_81] : memref<1x4x256xf32, #tpu.memory_space<vmem>>, vector<1x4x256xf32>
    %125 = vector.shape_cast %124 : vector<1x4x256xf32> to vector<4x256xf32>
    %126 = vector.shape_cast %123 : vector<4x256xf32> to vector<1x4x256xf32>
    tpu.vector_store %arg8[%c0_79, %c0_80, %c0_81], %126 {strides = array<i32>} : memref<1x4x256xf32, #tpu.memory_space<vmem>>, vector<1x4x256xf32>,
    return
  }
  func.func @transform_0(%arg0: i32) -> (i32, i32, i32) {
    %c0_i32 = arith.constant 0 : i32
    %c0_i32_0 = arith.constant 0 : i32
    %c0_i32_1 = arith.constant 0 : i32
    return %arg0, %c0_i32, %c0_i32_0 : i32, i32, i32
  }
  func.func @transform_1(%arg0: i32) -> (i32, i32) {
    %c0_i32 = arith.constant 0 : i32
    %c0_i32_0 = arith.constant 0 : i32
    %c0_i32_1 = arith.constant 0 : i32
    return %c0_i32, %c0_i32_0 : i32, i32
  }
  func.func @transform_2(%arg0: i32) -> (i32, i32) {
    %c0_i32 = arith.constant 0 : i32
    %c0_i32_0 = arith.constant 0 : i32
    %c0_i32_1 = arith.constant 0 : i32
    return %c0_i32, %c0_i32_0 : i32, i32
  }
  func.func @transform_3(%arg0: i32) -> (i32, i32) {
    %c0_i32 = arith.constant 0 : i32
    %c0_i32_0 = arith.constant 0 : i32
    %c0_i32_1 = arith.constant 0 : i32
    return %c0_i32, %c0_i32_0 : i32, i32
  }
  func.func @transform_4(%arg0: i32) -> (i32, i32) {
    %c0_i32 = arith.constant 0 : i32
    %c0_i32_0 = arith.constant 0 : i32
    %c0_i32_1 = arith.constant 0 : i32
    return %c0_i32, %c0_i32_0 : i32, i32
  }
  func.func @transform_5(%arg0: i32) -> (i32, i32) {
    %c0_i32 = arith.constant 0 : i32
    %c0_i32_0 = arith.constant 0 : i32
    %c0_i32_1 = arith.constant 0 : i32
    return %c0_i32, %c0_i32_0 : i32, i32
  }
  func.func @transform_6(%arg0: i32) -> (i32, i32) {
    %c0_i32 = arith.constant 0 : i32
    %c0_i32_0 = arith.constant 0 : i32
    %c0_i32_1 = arith.constant 0 : i32
    return %c0_i32, %c0_i32_0 : i32, i32
  }
  func.func @transform_7(%arg0: i32) -> (i32, i32, i32) {
    %c0_i32 = arith.constant 0 : i32
    %c0_i32_0 = arith.constant 0 : i32
    %c0_i32_1 = arith.constant 0 : i32
    return %arg0, %c0_i32, %c0_i32_0 : i32, i32, i32
  }
}

</mosaic_0001>

<llo_original>
// kernel: tpu_custom_call.1
$region0: #{tpu_custom_call.1}
  #allocation0 [shape = 'u32[]', space=smem, size = 0x4, offset = 0x4, fixed_abs, tag = 'smem constant byte address 0x4 - core index']
  #allocation1 [shape = 'u32[144,128]{1,0:T(1,128)}', space=vmem, size = 0x12000, scoped, tag = 'internal scratch']
  #allocation2 [shape = 'bf16[16,290]{1,0:T(8,128)(2,1)}', space=vmem, size = 0x3000, scoped, tag = 'scratch operand']
  #allocation3 [shape = 'bf16[16,290]{1,0:T(8,128)(2,1)}', space=vmem, size = 0x3000, scoped, tag = 'scratch operand']
  %s0 = inlined_call_operand.vmem [shape: f32[2,4,256], index: 0, kind: input, shape index: {}]
  %s1 = inlined_call_operand.vmem [shape: bf16[8,144], index: 1, kind: input, shape index: {}]
  %s2 = inlined_call_operand.vmem [shape: bf16[4,144], index: 2, kind: input, shape index: {}]
  %s3 = inlined_call_operand.vmem [shape: f32[4,1], index: 3, kind: input, shape index: {}]
  %s4 = inlined_call_operand.vmem [shape: f32[4,1], index: 4, kind: input, shape index: {}]
  %s5 = inlined_call_operand.vmem [shape: f32[8,1], index: 5, kind: input, shape index: {}]
  %s6 = inlined_call_operand.vmem [shape: f32[8,1], index: 6, kind: input, shape index: {}]
  %s7 = inlined_call_operand.hbm [shape: f32[2,4,256], index: 7, kind: output, shape index: {}]
  %s8 = sld [smem:[#allocation0]]
  $region61: #{tpu_custom_call.1} parent=0
    _
  %s10 = ssub.s32 1, %s8
  %s11 = scalar_select 0, %s10, %s8
  $region1: #{tpu_custom_call.1} parent=0
    #allocation4 [shape = 'u8[8192]{0}', space=vmem, size = 0x2000, scoped, tag = 'output window, operand 0']
    #allocation5 [shape = 's32[2]{0}', space=sflag, size = 0x8, scoped, tag = 'scoped memory for tpu_custom_call.1']
    %12 = vsyncpa [#allocation5], 0
    %s13 = scalar_lea.sflag [#allocation5], 1
    %14 = vsyncpa %s13, 0
    loop: start=0, step=1, limit=4
    $region2: #{tpu_custom_call.1} parent=1 // loop_pre_header
      _
    $region3: #{tpu_custom_call.1} parent=1 // loop_header
      %s16 = sphi 0, %s20
      %p17 = scmp.ge.s32.totalorder %s16, 4
      %s26 = sphi 0, %s28
      %s29 = sphi 0, %s26
      %s30 = sphi 0, %s29
      %s46 = sphi 0, %s30
      %s50 = sphi 0, %s50
      %s52 = sphi 0, %s50
      %s53 = sphi 0, %s52
      %s67 = sphi 0, %s53
      %s71 = sphi 0, %s71
      %s73 = sphi 0, %s71
      %s74 = sphi 0, %s73
      %s88 = sphi 0, %s74
      %s92 = sphi 0, %s92
      %s94 = sphi 0, %s92
      %s95 = sphi 0, %s94
      %s109 = sphi 0, %s95
      %s113 = sphi 0, %s113
      %s115 = sphi 0, %s113
      %s116 = sphi 0, %s115
      %s130 = sphi 0, %s116
      %s134 = sphi 0, %s134
      %s136 = sphi 0, %s134
      %s137 = sphi 0, %s136
      %s151 = sphi 0, %s137
      %s155 = sphi 0, %s155
      %s157 = sphi 0, %s155
      %s158 = sphi 0, %s157
      %s172 = sphi 0, %s158
      %s178 = sphi 0, %s180
      %s181 = sphi 0, %s178
      %s182 = sphi 0, %s181
      %s198 = sphi 0, %s182
    $region4: #{tpu_custom_call.1} parent=1 // loop_header_branch
      %19 = sbr.rel (%p17) target = $region8
    $region5: #{tpu_custom_call.1} parent=1 // loop_body
      %s21 = ssub.s32 %s16, 1
      %s22 = ssub.s32 %s16, 2
      %s23 = sadd.s32 %s16, 1
      %s24 = ssub.s32 %s16, %s23
      %p25 = scmp.eq.s32.totalorder %s24, 0
      %s27 = sadd.s32 %s26, 1
      %s28 = scalar_select %p25, %s26, %s27
      %p31 = pneg %p25
      %p32 = scmp.eq.s32.totalorder %s16, 1
      %p33 = por %p31, %p32
      %p34 = scmp.ne.s32.totalorder %s26, %s29
      %p35 = scmp.eq.s32.totalorder %s16, 0
      %p36 = por %p34, %p35
      %p37 = scmp.ne.s32.totalorder %s26, %s29
      %p38 = scmp.eq.s32.totalorder %s21, 1
      %p39 = por %p37, %p38
      %p40 = scmp.ne.s32.totalorder %s29, %s30
      %p41 = scmp.eq.s32.totalorder %s21, 0
      %p42 = por %p40, %p41
      %p43 = scmp.ne.s32.totalorder %s29, %s30
      %p44 = scmp.eq.s32.totalorder %s22, 1
      %p45 = por %p43, %p44
      %p47 = scmp.ne.s32.totalorder %s30, %s46
      %p48 = scmp.eq.s32.totalorder %s22, 0
      %p49 = por %p47, %p48
      %s51 = sadd.s32 %s50, 1
      %p54 = scmp.eq.s32.totalorder %s16, 1
      %p55 = scmp.ne.s32.totalorder %s50, %s52
      %p56 = scmp.eq.s32.totalorder %s16, 0
      %p57 = por %p55, %p56
      %p58 = scmp.ne.s32.totalorder %s50, %s52
      %p59 = scmp.eq.s32.totalorder %s21, 1
      %p60 = por %p58, %p59
      %p61 = scmp.ne.s32.totalorder %s52, %s53
      %p62 = scmp.eq.s32.totalorder %s21, 0
      %p63 = por %p61, %p62
      %p64 = scmp.ne.s32.totalorder %s52, %s53
      %p65 = scmp.eq.s32.totalorder %s22, 1
      %p66 = por %p64, %p65
      %p68 = scmp.ne.s32.totalorder %s53, %s67
      %p69 = scmp.eq.s32.totalorder %s22, 0
      %p70 = por %p68, %p69
      %s72 = sadd.s32 %s71, 1
      %p75 = scmp.eq.s32.totalorder %s16, 1
      %p76 = scmp.ne.s32.totalorder %s71, %s73
      %p77 = scmp.eq.s32.totalorder %s16, 0
      %p78 = por %p76, %p77
      %p79 = scmp.ne.s32.totalorder %s71, %s73
      %p80 = scmp.eq.s32.totalorder %s21, 1
      %p81 = por %p79, %p80
      %p82 = scmp.ne.s32.totalorder %s73, %s74
      %p83 = scmp.eq.s32.totalorder %s21, 0
      %p84 = por %p82, %p83
      %p85 = scmp.ne.s32.totalorder %s73, %s74
      %p86 = scmp.eq.s32.totalorder %s22, 1
      %p87 = por %p85, %p86
      %p89 = scmp.ne.s32.totalorder %s74, %s88
      %p90 = scmp.eq.s32.totalorder %s22, 0
      %p91 = por %p89, %p90
      %s93 = sadd.s32 %s92, 1
      %p96 = scmp.eq.s32.totalorder %s16, 1
      %p97 = scmp.ne.s32.totalorder %s92, %s94
      %p98 = scmp.eq.s32.totalorder %s16, 0
      %p99 = por %p97, %p98
      %p100 = scmp.ne.s32.totalorder %s92, %s94
      %p101 = scmp.eq.s32.totalorder %s21, 1
      %p102 = por %p100, %p101
      %p103 = scmp.ne.s32.totalorder %s94, %s95
      %p104 = scmp.eq.s32.totalorder %s21, 0
      %p105 = por %p103, %p104
      %p106 = scmp.ne.s32.totalorder %s94, %s95
      %p107 = scmp.eq.s32.totalorder %s22, 1
      %p108 = por %p106, %p107
      %p110 = scmp.ne.s32.totalorder %s95, %s109
      %p111 = scmp.eq.s32.totalorder %s22, 0
      %p112 = por %p110, %p111
      %s114 = sadd.s32 %s113, 1
      %p117 = scmp.eq.s32.totalorder %s16, 1
      %p118 = scmp.ne.s32.totalorder %s113, %s115
      %p119 = scmp.eq.s32.totalorder %s16, 0
      %p120 = por %p118, %p119
      %p121 = scmp.ne.s32.totalorder %s113, %s115
      %p122 = scmp.eq.s32.totalorder %s21, 1
      %p123 = por %p121, %p122
      %p124 = scmp.ne.s32.totalorder %s115, %s116
      %p125 = scmp.eq.s32.totalorder %s21, 0
      %p126 = por %p124, %p125
      %p127 = scmp.ne.s32.totalorder %s115, %s116
      %p128 = scmp.eq.s32.totalorder %s22, 1
      %p129 = por %p127, %p128
      %p131 = scmp.ne.s32.totalorder %s116, %s130
      %p132 = scmp.eq.s32.totalorder %s22, 0
      %p133 = por %p131, %p132
      %s135 = sadd.s32 %s134, 1
      %p138 = scmp.eq.s32.totalorder %s16, 1
      %p139 = scmp.ne.s32.totalorder %s134, %s136
      %p140 = scmp.eq.s32.totalorder %s16, 0
      %p141 = por %p139, %p140
      %p142 = scmp.ne.s32.totalorder %s134, %s136
      %p143 = scmp.eq.s32.totalorder %s21, 1
      %p144 = por %p142, %p143
      %p145 = scmp.ne.s32.totalorder %s136, %s137
      %p146 = scmp.eq.s32.totalorder %s21, 0
      %p147 = por %p145, %p146
      %p148 = scmp.ne.s32.totalorder %s136, %s137
      %p149 = scmp.eq.s32.totalorder %s22, 1
      %p150 = por %p148, %p149
      %p152 = scmp.ne.s32.totalorder %s137, %s151
      %p153 = scmp.eq.s32.totalorder %s22, 0
      %p154 = por %p152, %p153
      %s156 = sadd.s32 %s155, 1
      %p159 = scmp.eq.s32.totalorder %s16, 1
      %p160 = scmp.ne.s32.totalorder %s155, %s157
      %p161 = scmp.eq.s32.totalorder %s16, 0
      %p162 = por %p160, %p161
      %p163 = scmp.ne.s32.totalorder %s155, %s157
      %p164 = scmp.eq.s32.totalorder %s21, 1
      %p165 = por %p163, %p164
      %p166 = scmp.ne.s32.totalorder %s157, %s158
      %p167 = scmp.eq.s32.totalorder %s21, 0
      %p168 = por %p166, %p167
      %p169 = scmp.ne.s32.totalorder %s157, %s158
      %p170 = scmp.eq.s32.totalorder %s22, 1
      %p171 = por %p169, %p170
      %p173 = scmp.ne.s32.totalorder %s158, %s172
      %p174 = scmp.eq.s32.totalorder %s22, 0
      %p175 = por %p173, %p174
      %s176 = ssub.s32 %s16, %s23
      %p177 = scmp.eq.s32.totalorder %s176, 0
      %s179 = sadd.s32 %s178, 1
      %s180 = scalar_select %p177, %s178, %s179
      %p183 = pneg %p177
      %p184 = scmp.eq.s32.totalorder %s16, 1
      %p185 = por %p183, %p184
      %p186 = scmp.ne.s32.totalorder %s178, %s181
      %p187 = scmp.eq.s32.totalorder %s16, 0
      %p188 = por %p186, %p187
      %p189 = scmp.ne.s32.totalorder %s178, %s181
      %p190 = scmp.eq.s32.totalorder %s21, 1
      %p191 = por %p189, %p190
      %p192 = scmp.ne.s32.totalorder %s181, %s182
      %p193 = scmp.eq.s32.totalorder %s21, 0
      %p194 = por %p192, %p193
      %p195 = scmp.ne.s32.totalorder %s181, %s182
      %p196 = scmp.eq.s32.totalorder %s22, 1
      %p197 = por %p195, %p196
      %p199 = scmp.ne.s32.totalorder %s182, %s198
      %p200 = scmp.eq.s32.totalorder %s22, 0
      %p201 = por %p199, %p200
      %p202 = scmp.le.s32.totalorder 1, %s16
      %p203 = scmp.lt.s32.totalorder %s16, 3
      %p204 = pnand %p202, %p203
      %p205 = pneg %p204
      // Predicated region
      $region9: #{tpu_custom_call.1} parent=5 // pred_check
        _
      $region10: #{tpu_custom_call.1} parent=5 // pred_check_branch
        %207 = sbr.rel (%p204) target = $region12
      $region11: #{tpu_custom_call.1} parent=5 // pred_region
        %s208 = ssub.s32 %s16, 1
        // Predicated region
        $region13: #{tpu_custom_call.1} parent=11 // pred_check
          %p209 = pneg %p63
        $region14: #{tpu_custom_call.1} parent=11 // pred_check_branch
          %211 = sbr.rel (%p209) target = $region16
        $region15: #{tpu_custom_call.1} parent=11 // pred_region
          _
        $region16: #{tpu_custom_call.1} parent=11 // pred_fallthru
          _
        // Predicated region
        $region17: #{tpu_custom_call.1} parent=11 // pred_check
          %p212 = pneg %p84
        $region18: #{tpu_custom_call.1} parent=11 // pred_check_branch
          %214 = sbr.rel (%p212) target = $region20
        $region19: #{tpu_custom_call.1} parent=11 // pred_region
          _
        $region20: #{tpu_custom_call.1} parent=11 // pred_fallthru
          _
        // Predicated region
        $region21: #{tpu_custom_call.1} parent=11 // pred_check
          %p215 = pneg %p105
        $region22: #{tpu_custom_call.1} parent=11 // pred_check_branch
          %217 = sbr.rel (%p215) target = $region24
        $region23: #{tpu_custom_call.1} parent=11 // pred_region
          _
        $region24: #{tpu_custom_call.1} parent=11 // pred_fallthru
          _
        // Predicated region
        $region25: #{tpu_custom_call.1} parent=11 // pred_check
          %p218 = pneg %p126
        $region26: #{tpu_custom_call.1} parent=11 // pred_check_branch
          %220 = sbr.rel (%p218) target = $region28
        $region27: #{tpu_custom_call.1} parent=11 // pred_region
          _
        $region28: #{tpu_custom_call.1} parent=11 // pred_fallthru
          _
        // Predicated region
        $region29: #{tpu_custom_call.1} parent=11 // pred_check
          %p221 = pneg %p147
        $region30: #{tpu_custom_call.1} parent=11 // pred_check_branch
          %223 = sbr.rel (%p221) target = $region32
        $region31: #{tpu_custom_call.1} parent=11 // pred_region
          _
        $region32: #{tpu_custom_call.1} parent=11 // pred_fallthru
          _
        // Predicated region
        $region33: #{tpu_custom_call.1} parent=11 // pred_check
          %p224 = pneg %p168
        $region34: #{tpu_custom_call.1} parent=11 // pred_check_branch
          %226 = sbr.rel (%p224) target = $region36
        $region35: #{tpu_custom_call.1} parent=11 // pred_region
          _
        $region36: #{tpu_custom_call.1} parent=11 // pred_fallthru
          _
      $region12: #{tpu_custom_call.1} parent=5 // pred_fallthru
        _
      %p227 = scmp.lt.s32.totalorder %s16, 2
      // Predicated region
      $region37: #{tpu_custom_call.1} parent=5 // pred_check
        %p228 = pneg %p227
      $region38: #{tpu_custom_call.1} parent=5 // pred_check_branch
        %230 = sbr.rel (%p228) target = $region40
      $region39: #{tpu_custom_call.1} parent=5 // pred_region
        // Predicated region
        $region41: #{tpu_custom_call.1} parent=39 // pred_check
          %p231 = pneg %p36
        $region42: #{tpu_custom_call.1} parent=39 // pred_check_branch
          %233 = sbr.rel (%p231) target = $region44
        $region43: #{tpu_custom_call.1} parent=39 // pred_region
          %p234 = scmp.lt.s32.totalorder %s16, 1
          %s235 = scalar_select %p234, %s16, 1
          %s236 = smul.addr %s235, 2
          %s237 = smul.addr %s236, 4
          %s238 = scalar_lea.vmem %s0, %s237
        $region44: #{tpu_custom_call.1} parent=39 // pred_fallthru
          _
      $region40: #{tpu_custom_call.1} parent=5 // pred_fallthru
        _
      %p239 = scmp.le.s32.totalorder 1, %s16
      %p240 = scmp.lt.s32.totalorder %s16, 3
      %p241 = pnand %p239, %p240
      %p242 = pneg %p241
      // Predicated region
      $region45: #{tpu_custom_call.1} parent=5 // pred_check
        _
      $region46: #{tpu_custom_call.1} parent=5 // pred_check_branch
        %244 = sbr.rel (%p241) target = $region48
      $region47: #{tpu_custom_call.1} parent=5 // pred_region
        %s245 = ssub.s32 %s16, 1
        %p246 = scmp.lt.s32.totalorder %s21, 1
        %s247 = scalar_select %p246, %s21, 1
        %s248 = smul.addr %s247, 2
        %s249 = smul.addr %s248, 4
        %s250 = scalar_lea.vmem %s0, %s249
        %p251 = pneg %p42
        %p252 = pneg %p39
        %p253 = pneg %p63
        %p254 = pneg %p60
        %p255 = pneg %p84
        %p256 = pneg %p81
        %p257 = pneg %p105
        %p258 = pneg %p102
        %p259 = pneg %p126
        %p260 = pneg %p123
        %p261 = pneg %p147
        %p262 = pneg %p144
        %p263 = pneg %p168
        %p264 = pneg %p165
        %p265 = pneg %p194
        %p266 = pneg %p191
        %s267 = sand.u32 %s181, 1
        %s268 = scalar_lea.sflag [#allocation5], %s267
        %s269 = sand.u32 %s181, 1
        %s270 = smul.addr %s269, 8
        %s271 = scalar_lea.vmem [#allocation4], %s270
        %p272 = scmp.lt.s32.totalorder %s21, 1
        %s273 = scalar_select %p272, %s21, 1
        %s274 = smul.addr %s273, 2
        %s275 = smul.addr %s274, 4
        %s276 = scalar_lea.vmem %s0, %s275
        %v280 = vlaneseq
        %v281 = vand.u32 %v280, 127
        %v282 = vadd.s32 %v281, 128
        %v283 = vand.u32 %v281, 15
        %v284 = vand.u32 %v282, 15
        %vm285 = vcmp.ne.s32.totalorder %v283, 0
        %vm286 = vcmp.ne.s32.totalorder %v284, 0
        %vm287 = vcmp.ne.s32.totalorder %v283, 15
        %vm288 = vcmp.ne.s32.totalorder %v284, 15
        %v289 = vld [vmem:[%s276] sm:$0xff]
        %v290 = vld [vmem:[%s3] sm:$0xf]
        %292 = vset.pattern.permute.xlu0 0
        %293 = vperm.xlu0 %292, %v290
        %v294 = vpop.permute.xlu0 %293
        %v296 = vunpack.c.l.s4 839922192
        %v297 = vunpack.c.0.s8 %v296
        %v298 = vlaneseq
        %v299 = vshrl.u32 %v298, 7
        %v300 = vsub.s32 %v297, %v299
        %v301 = vrot.slane %v294, %v300
        %v303 = vmul.f32 %v289, %v301
        %v304 = vld [vmem:[%s4] sm:$0xf]
        %306 = vset.pattern.permute.xlu0 0
        %307 = vperm.xlu0 %306, %v304
        %v308 = vpop.permute.xlu0 %307
        %v310 = vunpack.c.l.s4 839922192
        %v311 = vunpack.c.0.s8 %v310
        %v312 = vlaneseq
        %v313 = vshrl.u32 %v312, 7
        %v314 = vsub.s32 %v311, %v313
        %v315 = vrot.slane %v308, %v314
        %v317 = vadd.f32 %v303, %v315
        %v318 = vmul.f32 %v317, 0.5
        %v319 = vmul.f32 %v317, 0.70710677
        %v320 = verf.f32.pop %v319
        %v321 = vadd.f32 %v320, 1.0
        %v322 = vmul.f32 %v318, %v321
        %vm323 = vcmask 132096
        %324 = vst.msk [vmem:[#allocation2] sm:$0x3] %vm323, 0
        %vm325 = vcmask 271496
        %326 = vst.msk [vmem:[#allocation2 + $0x8] sm:$0x3] %vm325, 0
        %v328 = vcombine.high %v322, %v322
        %v330 = vpack.c.bf16 %v322, %v322
        %v331 = vpack.c.bf16 %v328, %v328
        %v334 = vunpack.c.l.b16 %v330
        %v335 = vunpack.c.l.b16 %v331
        %v336 = vpack.c.b16 %v335, %v334
        %337 = vrot.lane.b32.xlu0 %v336, 17
        %v338 = vpop.permute.xlu0 %337
        %v339 = vrot.slane %v338, 4
        %vm340 = vcmask 138240
        %v341 = vsel %vm340, %v339, %v338
        %vm344 = vcmask 1041544
        %vm345 = vcmask 1045508
        %vm346 = vmor %vm345, %vm344
        %347 = vst.msk [vmem:[#allocation2] sm:$0x33] %vm346, %v341
        %348 = vst.msk [vmem:[#allocation2 + $0x8] sm:$0x3] %vm323, %v339
        %349 = vst [vmem:[#allocation2] sm:$0xcc] 0
        %vm350 = vcmask 273410
        %351 = vst.msk [vmem:[#allocation2 + $0x8] sm:$0xc] %vm350, 0
        %352 = vst [vmem:[#allocation2 + $0xc] sm:$0xff] 0
        %vm353 = vcmask 273408
        %354 = vst.msk [vmem:[#allocation2 + $0x14] sm:$0xf] %vm353, 0
        %v355 = vld [vmem:[#allocation2] sm:$0xff]
        %v356 = vld [vmem:[#allocation2 + $0xc] sm:$0xff]
        %v357 = vsel %vm285, 1, 0
        %v358 = vsel %vm286, 1, 0
        %vm359 = vcmp.eq.s32.totalorder %v357, 1
        %vm360 = vcmp.eq.s32.totalorder %v358, 1
        %vm361 = vmpackc.low %vm360, %vm359
        %v362 = vsel %vm361, %v355, 0
        %v363 = vsel %vm361, %v356, 0
        %v364 = vld [vmem:[#allocation2 + $0x8] sm:$0xf]
        %v365 = vld [vmem:[#allocation2 + $0x14] sm:$0xf]
        %v366 = vsel %vm287, 1, 0
        %v367 = vsel %vm288, 1, 0
        %vm368 = vcmp.eq.s32.totalorder %v366, 1
        %vm369 = vcmp.eq.s32.totalorder %v367, 1
        %vm370 = vmpackc.low %vm369, %vm368
        %v371 = vsel %vm370, 65537, 0
        %372 = vrot.lane.b32.xlu0 %v371, 2
        %v373 = vpop.permute.xlu0 %372
        %v374 = vrot.slane %v373, 4
        %vm375 = vcmask 15360
        %v376 = vsel %vm375, %v374, %v373
        %vm377 = vcmp.ne.s16.totalorder %v376, 0
        %vm378 = vcmp.ne.s16.totalorder %v374, 0
        %v379 = vsel %vm377, %v355, 0
        %v380 = vsel %vm378, %v364, 0
        %v381 = vsel %vm377, %v356, 0
        %v382 = vsel %vm378, %v365, 0
        %v383 = vsel %vm361, 65537, 0
        %384 = vrot.lane.b32.xlu0 %v383, 16
        %v385 = vpop.permute.xlu0 %384
        %v386 = vrot.slane %v385, 4
        %vm387 = vcmask 130048
        %v388 = vsel %vm387, %v386, %v385
        %vm389 = vcmp.ne.s16.totalorder %v388, 0
        %vm390 = vcmp.ne.s16.totalorder %v386, 0
        %v391 = vsel %vm389, %v355, 0
        %v392 = vsel %vm390, %v364, 0
        %v393 = vsel %vm389, %v356, 0
        %v394 = vsel %vm390, %v365, 0
        %395 = vrot.lane.b32.xlu0 %v371, 18
        %v396 = vpop.permute.xlu0 %395
        %v397 = vrot.slane %v396, 4
        %vm398 = vcmask 146432
        %v399 = vsel %vm398, %v397, %v396
        %vm400 = vcmp.ne.s16.totalorder %v399, 0
        %vm401 = vcmp.ne.s16.totalorder %v397, 0
        %v402 = vsel %vm400, %v355, 0
        %v403 = vsel %vm401, %v364, 0
        %v404 = vsel %vm400, %v356, 0
        %v405 = vsel %vm401, %v365, 0
        %406 = vrot.lane.b32.xlu0 %v383, 32
        %v407 = vpop.permute.xlu0 %406
        %v408 = vrot.slane %v407, 4
        %vm409 = vcmask 261120
        %v410 = vsel %vm409, %v408, %v407
        %vm411 = vcmp.ne.s16.totalorder %v410, 0
        %vm412 = vcmp.ne.s16.totalorder %v408, 0
        %v413 = vsel %vm411, %v355, 0
        %v414 = vsel %vm412, %v364, 0
        %v415 = vsel %vm411, %v356, 0
        %v416 = vsel %vm412, %v365, 0
        %417 = vrot.lane.b32.xlu0 %v371, 34
        %v418 = vpop.permute.xlu0 %417
        %v419 = vrot.slane %v418, 4
        %vm420 = vcmask 277504
        %v421 = vsel %vm420, %v419, %v418
        %vm422 = vcmp.ne.s16.totalorder %v421, 0
        %vm423 = vcmp.ne.s16.totalorder %v419, 0
        %v424 = vsel %vm422, %v355, 0
        %v425 = vsel %vm423, %v364, 0
        %v426 = vsel %vm422, %v356, 0
        %v427 = vsel %vm423, %v365, 0
        %v430 = vunpack.c.l.b16 %v362
        %v431 = vunpack.c.h.b16 %v362
        %v432 = vunpack.c.l.b16 %v363
        %v433 = vunpack.c.h.b16 %v363
        %v434 = vpack.c.b16 %v432, %v430
        %v435 = vpack.c.b16 %v433, %v431
        %v442 = vunpack.c.l.b16 %v355
        %v443 = vunpack.c.h.b16 %v355
        %v444 = vunpack.c.l.b16 %v364
        %v445 = vunpack.c.l.b16 %v356
        %v446 = vunpack.c.h.b16 %v356
        %v447 = vunpack.c.l.b16 %v365
        %v448 = vpack.c.b16 %v445, %v442
        %v449 = vpack.c.b16 %v446, %v443
        %v450 = vpack.c.b16 %v447, %v444
        %451 = vrot.lane.b32.xlu0 %v448, 127
        %v452 = vpop.permute.xlu0 %451
        %453 = vrot.lane.b32.xlu0 %v449, 127
        %v454 = vpop.permute.xlu0 %453
        %455 = vrot.lane.b32.xlu0 %v450, 127
        %v456 = vpop.permute.xlu0 %455
        %vm457 = vcmask 1039360
        %v458 = vsel %vm457, %v452, %v454
        %v459 = vsel %vm457, %v454, %v456
        %v466 = vunpack.c.l.b16 %v379
        %v467 = vunpack.c.h.b16 %v379
        %v468 = vunpack.c.l.b16 %v380
        %v469 = vunpack.c.l.b16 %v381
        %v470 = vunpack.c.h.b16 %v381
        %v471 = vunpack.c.l.b16 %v382
        %v472 = vpack.c.b16 %v469, %v466
        %v473 = vpack.c.b16 %v470, %v467
        %v474 = vpack.c.b16 %v471, %v468
        %475 = vrot.lane.b32.xlu0 %v472, 126
        %v476 = vpop.permute.xlu0 %475
        %477 = vrot.lane.b32.xlu0 %v473, 126
        %v478 = vpop.permute.xlu0 %477
        %479 = vrot.lane.b32.xlu0 %v474, 126
        %v480 = vpop.permute.xlu0 %479
        %vm481 = vcmask 1031168
        %v482 = vsel %vm481, %v476, %v478
        %v483 = vsel %vm481, %v478, %v480
        %v490 = vunpack.c.l.b16 %v391
        %v491 = vunpack.c.h.b16 %v391
        %v492 = vunpack.c.l.b16 %v392
        %v493 = vunpack.c.l.b16 %v393
        %v494 = vunpack.c.h.b16 %v393
        %v495 = vunpack.c.l.b16 %v394
        %v496 = vpack.c.b16 %v493, %v490
        %v497 = vpack.c.b16 %v494, %v491
        %v498 = vpack.c.b16 %v495, %v492
        %499 = vrot.lane.b32.xlu0 %v496, 112
        %v500 = vpop.permute.xlu0 %499
        %501 = vrot.lane.b32.xlu0 %v497, 112
        %v502 = vpop.permute.xlu0 %501
        %503 = vrot.lane.b32.xlu0 %v498, 112
        %v504 = vpop.permute.xlu0 %503
        %vm505 = vcmask 916480
        %v506 = vsel %vm505, %v500, %v502
        %v507 = vsel %vm505, %v502, %v504
        %510 = vrot.lane.b32.xlu0 %v448, 111
        %v511 = vpop.permute.xlu0 %510
        %512 = vrot.lane.b32.xlu0 %v449, 111
        %v513 = vpop.permute.xlu0 %512
        %514 = vrot.lane.b32.xlu0 %v450, 111
        %v515 = vpop.permute.xlu0 %514
        %vm516 = vcmask 908288
        %v517 = vsel %vm516, %v511, %v513
        %v518 = vsel %vm516, %v513, %v515
        %v525 = vunpack.c.l.b16 %v402
        %v526 = vunpack.c.h.b16 %v402
        %v527 = vunpack.c.l.b16 %v403
        %v528 = vunpack.c.l.b16 %v404
        %v529 = vunpack.c.h.b16 %v404
        %v530 = vunpack.c.l.b16 %v405
        %v531 = vpack.c.b16 %v528, %v525
        %v532 = vpack.c.b16 %v529, %v526
        %v533 = vpack.c.b16 %v530, %v527
        %534 = vrot.lane.b32.xlu0 %v531, 110
        %v535 = vpop.permute.xlu0 %534
        %536 = vrot.lane.b32.xlu0 %v532, 110
        %v537 = vpop.permute.xlu0 %536
        %538 = vrot.lane.b32.xlu0 %v533, 110
        %v539 = vpop.permute.xlu0 %538
        %vm540 = vcmask 900096
        %v541 = vsel %vm540, %v535, %v537
        %v542 = vsel %vm540, %v537, %v539
        %v549 = vunpack.c.l.b16 %v413
        %v550 = vunpack.c.h.b16 %v413
        %v551 = vunpack.c.l.b16 %v414
        %v552 = vunpack.c.l.b16 %v415
        %v553 = vunpack.c.h.b16 %v415
        %v554 = vunpack.c.l.b16 %v416
        %v555 = vpack.c.b16 %v552, %v549
        %v556 = vpack.c.b16 %v553, %v550
        %v557 = vpack.c.b16 %v554, %v551
        %558 = vrot.lane.b32.xlu0 %v555, 96
        %v559 = vpop.permute.xlu0 %558
        %560 = vrot.lane.b32.xlu0 %v556, 96
        %v561 = vpop.permute.xlu0 %560
        %562 = vrot.lane.b32.xlu0 %v557, 96
        %v563 = vpop.permute.xlu0 %562
        %vm564 = vcmask 785408
        %v565 = vsel %vm564, %v559, %v561
        %v566 = vsel %vm564, %v561, %v563
        %569 = vrot.lane.b32.xlu0 %v448, 95
        %v570 = vpop.permute.xlu0 %569
        %571 = vrot.lane.b32.xlu0 %v449, 95
        %v572 = vpop.permute.xlu0 %571
        %573 = vrot.lane.b32.xlu0 %v450, 95
        %v574 = vpop.permute.xlu0 %573
        %vm575 = vcmask 777216
        %v576 = vsel %vm575, %v570, %v572
        %v577 = vsel %vm575, %v572, %v574
        %v584 = vunpack.c.l.b16 %v424
        %v585 = vunpack.c.h.b16 %v424
        %v586 = vunpack.c.l.b16 %v425
        %v587 = vunpack.c.l.b16 %v426
        %v588 = vunpack.c.h.b16 %v426
        %v589 = vunpack.c.l.b16 %v427
        %v590 = vpack.c.b16 %v587, %v584
        %v591 = vpack.c.b16 %v588, %v585
        %v592 = vpack.c.b16 %v589, %v586
        %593 = vrot.lane.b32.xlu0 %v590, 94
        %v594 = vpop.permute.xlu0 %593
        %595 = vrot.lane.b32.xlu0 %v591, 94
        %v596 = vpop.permute.xlu0 %595
        %597 = vrot.lane.b32.xlu0 %v592, 94
        %v598 = vpop.permute.xlu0 %597
        %vm599 = vcmask 769024
        %v600 = vsel %vm599, %v594, %v596
        %v601 = vsel %vm599, %v596, %v598
        %v604 = vld [vmem:[%s1] sm:$0xff]
        %v606 = vunpack.c.l.b16 %v604
        %v607 = vunpack.c.h.b16 %v604
        %v608 = vpack.c.b16 %v606, %v606
        %v609 = vpack.c.b16 %v607, %v607
        %vm611 = vcmask 130048
        %v613 = vsel %vm611, %v609, 0
        %615 = vmatprep.subr.bf16.mxu0 %v577
        %616 = vmatpush1.bf16.msra.mxu0 %v576
        %617 = vmatprep.subr.bf16.mxu0 %v566
        %618 = vmatpush1.bf16.msra.mxu0 %v565
        %619 = vmatprep.subr.bf16.mxu0 %v542
        %620 = vmatpush1.bf16.msra.mxu0 %v541
        %621 = vmatprep.subr.bf16.mxu0 %v518
        %622 = vmatpush1.bf16.msra.mxu0 %v517
        %623 = vmatprep.subr.bf16.mxu0 %v507
        %624 = vmatpush1.bf16.msra.mxu0 %v506
        %625 = vmatprep.subr.bf16.mxu0 %v483
        %626 = vmatpush1.bf16.msra.mxu0 %v482
        %627 = vmatprep.subr.bf16.mxu0 %v459
        %628 = vmatpush1.bf16.msra.mxu0 %v458
        %629 = vmatprep.subr.bf16.mxu0 %v435
        %630 = vmatpush1.bf16.msra.mxu0 %v434
        %631 = vmatprep.subr.bf16.mxu0 0
        %632 = vmatpush2.bf16.msra.mxu0 0
        %633 = vmatprep.subr.bf16.mxu0 0
        %634 = vmatpush2.bf16.msra.mxu0 0
        %635 = vmatprep.subr.bf16.mxu0 0
        %636 = vmatpush2.bf16.msra.mxu0 0
        %637 = vmatprep.subr.bf16.mxu0 0
        %638 = vmatpush2.bf16.msra.mxu0 0
        %639 = vmatprep.subr.bf16.mxu0 0
        %640 = vmatpush2.bf16.msra.mxu0 0
        %641 = vmatprep.subr.bf16.mxu0 0
        %642 = vmatpush2.bf16.msra.mxu0 0
        %643 = vmatprep.subr.bf16.mxu0 0
        %644 = vmatpush2.bf16.msra.mxu0 0
        %645 = vmatprep.subr.bf16.mxu0 %v601
        %646 = vmatpush2.bf16.msra.mxu0 %v600
        %647 = vmatprep.mubr.bf16.mxu0 %v613
        %648 = vmatmul.mubr.bf16.gmra.mxu0 %v608
        %v649 = vpop.f32.mrf.mxu0
        %v650 = vadd.f32 0.0, %v649
        %v651 = vpop.f32.mrf.mxu0
        %v652 = vadd.f32 0.0, %v651
        %v653 = vpop.f32.mrf.mxu0
        %v654 = vpop.f32.mrf.mxu0
        %655 = vdwg.mxu0
        %v656 = vld [vmem:[%s5] sm:$0xff]
        %658 = vset.pattern.permute.xlu0 0
        %659 = vperm.xlu0 %658, %v656
        %v660 = vpop.permute.xlu0 %659
        %v662 = vmul.f32 %v650, %v660
        %v663 = vmul.f32 %v652, %v660
        %v664 = vld [vmem:[%s6] sm:$0xff]
        %666 = vset.pattern.permute.xlu0 0
        %667 = vperm.xlu0 %666, %v664
        %v668 = vpop.permute.xlu0 %667
        %v670 = vadd.f32 %v662, %v668
        %v671 = vadd.f32 %v663, %v668
        %v672 = vmul.f32 %v670, 0.5
        %v673 = vmul.f32 %v671, 0.5
        %v674 = vmul.f32 %v670, 0.70710677
        %v675 = vmul.f32 %v671, 0.70710677
        %v676 = verf.f32.pop %v674
        %v677 = verf.f32.pop %v675
        %v678 = vadd.f32 %v676, 1.0
        %v679 = vadd.f32 %v677, 1.0
        %v680 = vmul.f32 %v672, %v678
        %v681 = vmul.f32 %v673, %v679
        %vm682 = vcmask 134144
        %683 = vst.msk [vmem:[#allocation3] sm:$0xf] %vm682, 0
        %vm684 = vcmask 273544
        %685 = vst.msk [vmem:[#allocation3 + $0x8] sm:$0xf] %vm684, 0
        %v686 = vpack.c.bf16 %v680, %v680
        %v687 = vpack.c.bf16 %v681, %v681
        %v690 = vunpack.c.l.b16 %v686
        %v691 = vunpack.c.l.b16 %v687
        %v692 = vpack.c.b16 %v691, %v690
        %693 = vrot.lane.b32.xlu0 %v692, 17
        %v694 = vpop.permute.xlu0 %693
        %v695 = vrot.slane %v694, 4
        %v696 = vsel %vm340, %v695, %v694
        %vm699 = vcmask 1043592
        %vm700 = vcmask 1047556
        %vm701 = vmor %vm700, %vm699
        %702 = vst.msk [vmem:[#allocation3] sm:$0xff] %vm701, %v696
        %703 = vst.msk [vmem:[#allocation3 + $0x8] sm:$0xf] %vm682, %v695
        %704 = vst [vmem:[#allocation3 + $0xc] sm:$0xff] 0
        %705 = vst.msk [vmem:[#allocation3 + $0x14] sm:$0xf] %vm353, 0
        %v706 = vld [vmem:[#allocation3] sm:$0xff]
        %v707 = vld [vmem:[#allocation3 + $0xc] sm:$0xff]
        %v708 = vsel %vm361, %v706, 0
        %v709 = vsel %vm361, %v707, 0
        %v710 = vld [vmem:[#allocation3 + $0x8] sm:$0xf]
        %v711 = vld [vmem:[#allocation3 + $0x14] sm:$0xf]
        %v712 = vsel %vm377, %v706, 0
        %v713 = vsel %vm378, %v710, 0
        %v714 = vsel %vm377, %v707, 0
        %v715 = vsel %vm378, %v711, 0
        %v716 = vsel %vm389, %v706, 0
        %v717 = vsel %vm390, %v710, 0
        %v718 = vsel %vm389, %v707, 0
        %v719 = vsel %vm390, %v711, 0
        %v720 = vsel %vm400, %v706, 0
        %v721 = vsel %vm401, %v710, 0
        %v722 = vsel %vm400, %v707, 0
        %v723 = vsel %vm401, %v711, 0
        %v724 = vsel %vm411, %v706, 0
        %v725 = vsel %vm412, %v710, 0
        %v726 = vsel %vm411, %v707, 0
        %v727 = vsel %vm412, %v711, 0
        %v728 = vsel %vm422, %v706, 0
        %v729 = vsel %vm423, %v710, 0
        %v730 = vsel %vm422, %v707, 0
        %v731 = vsel %vm423, %v711, 0
        %v734 = vunpack.c.l.b16 %v708
        %v735 = vunpack.c.h.b16 %v708
        %v736 = vunpack.c.l.b16 %v709
        %v737 = vunpack.c.h.b16 %v709
        %v738 = vpack.c.b16 %v736, %v734
        %v739 = vpack.c.b16 %v737, %v735
        %v746 = vunpack.c.l.b16 %v706
        %v747 = vunpack.c.h.b16 %v706
        %v748 = vunpack.c.l.b16 %v710
        %v749 = vunpack.c.l.b16 %v707
        %v750 = vunpack.c.h.b16 %v707
        %v751 = vunpack.c.l.b16 %v711
        %v752 = vpack.c.b16 %v749, %v746
        %v753 = vpack.c.b16 %v750, %v747
        %v754 = vpack.c.b16 %v751, %v748
        %755 = vrot.lane.b32.xlu0 %v752, 127
        %v756 = vpop.permute.xlu0 %755
        %757 = vrot.lane.b32.xlu0 %v753, 127
        %v758 = vpop.permute.xlu0 %757
        %759 = vrot.lane.b32.xlu0 %v754, 127
        %v760 = vpop.permute.xlu0 %759
        %v761 = vsel %vm457, %v756, %v758
        %v762 = vsel %vm457, %v758, %v760
        %v769 = vunpack.c.l.b16 %v712
        %v770 = vunpack.c.h.b16 %v712
        %v771 = vunpack.c.l.b16 %v713
        %v772 = vunpack.c.l.b16 %v714
        %v773 = vunpack.c.h.b16 %v714
        %v774 = vunpack.c.l.b16 %v715
        %v775 = vpack.c.b16 %v772, %v769
        %v776 = vpack.c.b16 %v773, %v770
        %v777 = vpack.c.b16 %v774, %v771
        %778 = vrot.lane.b32.xlu0 %v775, 126
        %v779 = vpop.permute.xlu0 %778
        %780 = vrot.lane.b32.xlu0 %v776, 126
        %v781 = vpop.permute.xlu0 %780
        %782 = vrot.lane.b32.xlu0 %v777, 126
        %v783 = vpop.permute.xlu0 %782
        %v784 = vsel %vm481, %v779, %v781
        %v785 = vsel %vm481, %v781, %v783
        %v792 = vunpack.c.l.b16 %v716
        %v793 = vunpack.c.h.b16 %v716
        %v794 = vunpack.c.l.b16 %v717
        %v795 = vunpack.c.l.b16 %v718
        %v796 = vunpack.c.h.b16 %v718
        %v797 = vunpack.c.l.b16 %v719
        %v798 = vpack.c.b16 %v795, %v792
        %v799 = vpack.c.b16 %v796, %v793
        %v800 = vpack.c.b16 %v797, %v794
        %801 = vrot.lane.b32.xlu0 %v798, 112
        %v802 = vpop.permute.xlu0 %801
        %803 = vrot.lane.b32.xlu0 %v799, 112
        %v804 = vpop.permute.xlu0 %803
        %805 = vrot.lane.b32.xlu0 %v800, 112
        %v806 = vpop.permute.xlu0 %805
        %v807 = vsel %vm505, %v802, %v804
        %v808 = vsel %vm505, %v804, %v806
        %811 = vrot.lane.b32.xlu0 %v752, 111
        %v812 = vpop.permute.xlu0 %811
        %813 = vrot.lane.b32.xlu0 %v753, 111
        %v814 = vpop.permute.xlu0 %813
        %815 = vrot.lane.b32.xlu0 %v754, 111
        %v816 = vpop.permute.xlu0 %815
        %v817 = vsel %vm516, %v812, %v814
        %v818 = vsel %vm516, %v814, %v816
        %v825 = vunpack.c.l.b16 %v720
        %v826 = vunpack.c.h.b16 %v720
        %v827 = vunpack.c.l.b16 %v721
        %v828 = vunpack.c.l.b16 %v722
        %v829 = vunpack.c.h.b16 %v722
        %v830 = vunpack.c.l.b16 %v723
        %v831 = vpack.c.b16 %v828, %v825
        %v832 = vpack.c.b16 %v829, %v826
        %v833 = vpack.c.b16 %v830, %v827
        %834 = vrot.lane.b32.xlu0 %v831, 110
        %v835 = vpop.permute.xlu0 %834
        %836 = vrot.lane.b32.xlu0 %v832, 110
        %v837 = vpop.permute.xlu0 %836
        %838 = vrot.lane.b32.xlu0 %v833, 110
        %v839 = vpop.permute.xlu0 %838
        %v840 = vsel %vm540, %v835, %v837
        %v841 = vsel %vm540, %v837, %v839
        %v848 = vunpack.c.l.b16 %v724
        %v849 = vunpack.c.h.b16 %v724
        %v850 = vunpack.c.l.b16 %v725
        %v851 = vunpack.c.l.b16 %v726
        %v852 = vunpack.c.h.b16 %v726
        %v853 = vunpack.c.l.b16 %v727
        %v854 = vpack.c.b16 %v851, %v848
        %v855 = vpack.c.b16 %v852, %v849
        %v856 = vpack.c.b16 %v853, %v850
        %857 = vrot.lane.b32.xlu0 %v854, 96
        %v858 = vpop.permute.xlu0 %857
        %859 = vrot.lane.b32.xlu0 %v855, 96
        %v860 = vpop.permute.xlu0 %859
        %861 = vrot.lane.b32.xlu0 %v856, 96
        %v862 = vpop.permute.xlu0 %861
        %v863 = vsel %vm564, %v858, %v860
        %v864 = vsel %vm564, %v860, %v862
        %867 = vrot.lane.b32.xlu0 %v752, 95
        %v868 = vpop.permute.xlu0 %867
        %869 = vrot.lane.b32.xlu0 %v753, 95
        %v870 = vpop.permute.xlu0 %869
        %871 = vrot.lane.b32.xlu0 %v754, 95
        %v872 = vpop.permute.xlu0 %871
        %v873 = vsel %vm575, %v868, %v870
        %v874 = vsel %vm575, %v870, %v872
        %v881 = vunpack.c.l.b16 %v728
        %v882 = vunpack.c.h.b16 %v728
        %v883 = vunpack.c.l.b16 %v729
        %v884 = vunpack.c.l.b16 %v730
        %v885 = vunpack.c.h.b16 %v730
        %v886 = vunpack.c.l.b16 %v731
        %v887 = vpack.c.b16 %v884, %v881
        %v888 = vpack.c.b16 %v885, %v882
        %v889 = vpack.c.b16 %v886, %v883
        %890 = vrot.lane.b32.xlu0 %v887, 94
        %v891 = vpop.permute.xlu0 %890
        %892 = vrot.lane.b32.xlu0 %v888, 94
        %v893 = vpop.permute.xlu0 %892
        %894 = vrot.lane.b32.xlu0 %v889, 94
        %v895 = vpop.permute.xlu0 %894
        %v896 = vsel %vm599, %v891, %v893
        %v897 = vsel %vm599, %v893, %v895
        %v900 = vld [vmem:[%s2] sm:$0xf]
        %v903 = vunpack.c.l.s4 1983009808
        %v904 = vunpack.c.0.s8 %v903
        %v905 = vlaneseq
        %v906 = vshrl.u32 %v905, 7
        %v907 = vsub.s32 %v904, %v906
        %v908 = vrot.slane %v900, %v907
        %v909 = vcombine.high %v908, %v908
        %v912 = vcombine.high %v289, %v289
        %v915 = vsel %vm611, %v909, 0
        %917 = vmatprep.subr.bf16.mxu0 %v874
        %918 = vmatpush1.bf16.msra.mxu0 %v873
        %919 = vmatprep.subr.bf16.mxu0 %v864
        %920 = vmatpush1.bf16.msra.mxu0 %v863
        %921 = vmatprep.subr.bf16.mxu0 %v841
        %922 = vmatpush1.bf16.msra.mxu0 %v840
        %923 = vmatprep.subr.bf16.mxu0 %v818
        %924 = vmatpush1.bf16.msra.mxu0 %v817
        %925 = vmatprep.subr.bf16.mxu0 %v808
        %926 = vmatpush1.bf16.msra.mxu0 %v807
        %927 = vmatprep.subr.bf16.mxu0 %v785
        %928 = vmatpush1.bf16.msra.mxu0 %v784
        %929 = vmatprep.subr.bf16.mxu0 %v762
        %930 = vmatpush1.bf16.msra.mxu0 %v761
        %931 = vmatprep.subr.bf16.mxu0 %v739
        %932 = vmatpush1.bf16.msra.mxu0 %v738
        %933 = vmatprep.subr.bf16.mxu0 0
        %934 = vmatpush2.bf16.msra.mxu0 0
        %935 = vmatprep.subr.bf16.mxu0 0
        %936 = vmatpush2.bf16.msra.mxu0 0
        %937 = vmatprep.subr.bf16.mxu0 0
        %938 = vmatpush2.bf16.msra.mxu0 0
        %939 = vmatprep.subr.bf16.mxu0 0
        %940 = vmatpush2.bf16.msra.mxu0 0
        %941 = vmatprep.subr.bf16.mxu0 0
        %942 = vmatpush2.bf16.msra.mxu0 0
        %943 = vmatprep.subr.bf16.mxu0 0
        %944 = vmatpush2.bf16.msra.mxu0 0
        %945 = vmatprep.subr.bf16.mxu0 0
        %946 = vmatpush2.bf16.msra.mxu0 0
        %947 = vmatprep.subr.bf16.mxu0 %v897
        %948 = vmatpush2.bf16.msra.mxu0 %v896
        %949 = vmatprep.mubr.bf16.mxu0 %v915
        %950 = vmatmul.mubr.bf16.gmra.mxu0 %v908
        %v951 = vpop.f32.mrf.mxu0
        %v952 = vadd.f32 %v289, %v951
        %v953 = vpop.f32.mrf.mxu0
        %v954 = vadd.f32 %v912, %v953
        %v955 = vpop.f32.mrf.mxu0
        %v956 = vpop.f32.mrf.mxu0
        %957 = vdwg.mxu0
        %v960 = vcombine.low %v952, %v954
        %962 = vst [vmem:[%s271] sm:$0xff] %v960
        %s963 = sand.u32 %s181, 1
        %s964 = scalar_lea.sflag [#allocation5], %s963
        %s965 = sand.u32 %s181, 1
        %s966 = smul.addr %s965, 8
        %s967 = scalar_lea.vmem [#allocation4], %s966
        // Predicated region
        $region49: #{tpu_custom_call.1} parent=47 // pred_check
          %p968 = pneg %p191
        $region50: #{tpu_custom_call.1} parent=47 // pred_check_branch
          %970 = sbr.rel (%p968) target = $region52
        $region51: #{tpu_custom_call.1} parent=47 // pred_region
          %s972 = ssub.s32 128, 128
          %973 = vsyncadd %s964, %s972
          %s974 = smul.addr %s21, 2
          %s975 = smul.addr %s974, 64
          %s976 = scalar_lea.hbm %s7, %s975
          %s978 = sshll.u32 %s967, 4
          %s979 = int_to_ptr.vmem [resolvable:$true] %s978
          %981 = dma.vmem_to_hbm [thread:$0]  %s979, 128, %s976, %s964
        $region52: #{tpu_custom_call.1} parent=47 // pred_fallthru
          _
      $region48: #{tpu_custom_call.1} parent=5 // pred_fallthru
        _
      %p982 = scmp.le.s32.totalorder 2, %s16
      // Predicated region
      $region53: #{tpu_custom_call.1} parent=5 // pred_check
        %p983 = pneg %p982
      $region54: #{tpu_custom_call.1} parent=5 // pred_check_branch
        %985 = sbr.rel (%p983) target = $region56
      $region55: #{tpu_custom_call.1} parent=5 // pred_region
        %s986 = ssub.s32 %s16, 2
        // Predicated region
        $region57: #{tpu_custom_call.1} parent=55 // pred_check
          %p987 = pneg %p197
        $region58: #{tpu_custom_call.1} parent=55 // pred_check_branch
          %989 = sbr.rel (%p987) target = $region60
        $region59: #{tpu_custom_call.1} parent=55 // pred_region
          %s990 = sand.u32 %s182, 1
          %s991 = scalar_lea.sflag [#allocation5], %s990
          %s992 = sand.u32 %s182, 1
          %s993 = smul.addr %s992, 8
          %s994 = scalar_lea.vmem [#allocation4], %s993
          %995 = dma.done %s991, 128
        $region60: #{tpu_custom_call.1} parent=55 // pred_fallthru
          _
      $region56: #{tpu_custom_call.1} parent=5 // pred_fallthru
        _
    $region6: #{tpu_custom_call.1} parent=1 // loop_footer
      %s20 = sadd.s32 1, %s16
    $region7: #{tpu_custom_call.1} parent=1 // loop_footer_branch
      %15 = sbr.rel target = $region3
    $region8: #{tpu_custom_call.1} parent=1 // loop_exit
      _
    %996 = vsyncpa [#allocation5], 1
    %s997 = scalar_lea.sflag [#allocation5], 1
    %998 = vsyncpa %s997, 1

</llo_original>
